<compile_context>
chip_gen: v5e
topology: v5e:2x2
jax: 0.10.0
libtpu: 0.0.40
codegen_flags: <defaults>
</compile_context>

<pallas_src>
import jax
import jax.numpy as jnp
from jax import lax
from jax.experimental import pallas as pl
from jax.experimental.pallas import tpu as pltpu


_UNROLL = 8          # rows gathered per unrolled chunk (also sublane alignment)


def _round_up(x, m):
    return (x + m - 1) // m * m


# ---------------------------------------------------------------------------
# Path A — resident tables: both embedding tables live whole in VMEM; rows are
# gathered with in-VMEM dynamic loads (no per-row DMA descriptors at all).
# ---------------------------------------------------------------------------
def _bpr_resident_kernel(u_idx_ref, p_idx_ref, n_idx_ref,   # SMEM (B_pad,) i32
                         user_vmem, item_vmem,               # VMEM full tables
                         pos_ref, neg_ref,                   # VMEM out (TB, 1) f32
                         u_buf, i_buf, j_buf):               # VMEM scratch (TB, Dp)
    tb = pos_ref.shape[0]
    base = pl.program_id(0) * tb

    def gather_chunk(c, carry):
        # Destination offset is a multiple of 8 sublanes -> full, aligned
        # (8, Dp) stores; sources are dynamic single-row loads from the
        # resident tables.
        r0 = pl.multiple_of(c * _UNROLL, _UNROLL)
        u_rows, i_rows, j_rows = [], [], []
        for k in range(_UNROLL):
            uu = u_idx_ref[base + r0 + k]
            pp = p_idx_ref[base + r0 + k]
            nn = n_idx_ref[base + r0 + k]
            u_rows.append(user_vmem[pl.ds(uu, 1), :])
            i_rows.append(item_vmem[pl.ds(pp, 1), :])
            j_rows.append(item_vmem[pl.ds(nn, 1), :])
        u_buf[pl.ds(r0, _UNROLL), :] = jnp.concatenate(u_rows, axis=0)
        i_buf[pl.ds(r0, _UNROLL), :] = jnp.concatenate(i_rows, axis=0)
        j_buf[pl.ds(r0, _UNROLL), :] = jnp.concatenate(j_rows, axis=0)
        return carry

    lax.fori_loop(0, tb // _UNROLL, gather_chunk, 0)

    u = u_buf[...]
    i = i_buf[...]
    j = j_buf[...]
    # Multiply in table dtype (bf16 stays bf16 on v6e/v7x); accumulate the lane
    # reduction in f32.  Output blocks are (TB, 1) columns -> the scores are
    # stored exactly as computed (no (TB,TB) diagonal trick, no relayout).
    pos_ref[...] = jnp.sum((u * i).astype(jnp.float32), axis=1, keepdims=True)
    neg_ref[...] = jnp.sum((u * j).astype(jnp.float32), axis=1, keepdims=True)


# ---------------------------------------------------------------------------
# Path B — tables stay in HBM: per-row DMA gather, double-buffered across
# batch tiles, unrolled descriptor issue, one aggregate wait per stream/slot.
# ---------------------------------------------------------------------------
def _bpr_hbm_kernel(u_idx_ref, p_idx_ref, n_idx_ref,     # SMEM (B_pad,) i32
                    user_hbm, item_hbm,                    # HBM refs (rows >= TB)
                    pos_ref, neg_ref,                      # VMEM out (TB, 1) f32
                    u_buf, i_buf, j_buf,                   # VMEM (2, TB, D)
                    sem):                                  # DMA sems (3, 2)
    tb = pos_ref.shape[0]
    b = pl.program_id(0)
    nb = pl.num_programs(0)

    def issue_tile(tile, slot):
        base = tile * tb

        def chunk(c, carry):
            r0 = c * _UNROLL
            for k in range(_UNROLL):
                r = r0 + k
                uu = u_idx_ref[base + r]
                pp = p_idx_ref[base + r]
                nn = n_idx_ref[base + r]
                pltpu.make_async_copy(user_hbm.at[pl.ds(uu, 1)],
                                      u_buf.at[slot, pl.ds(r, 1)],
                                      sem.at[0, slot]).start()
                pltpu.make_async_copy(item_hbm.at[pl.ds(pp, 1)],
                                      i_buf.at[slot, pl.ds(r, 1)],
                                      sem.at[1, slot]).start()
                pltpu.make_async_copy(item_hbm.at[pl.ds(nn, 1)],
                                      j_buf.at[slot, pl.ds(r, 1)],
                                      sem.at[2, slot]).start()
            return carry

        lax.fori_loop(0, tb // _UNROLL, chunk, 0)

    # Prime: the first grid step issues its own tile into slot 0.
    @pl.when(b == 0)
    def _():
        issue_tile(0, 0)

    # Cross-step prefetch: issue tile b+1 into the other slot before waiting
    # on / computing tile b (indices for b+1 are already in SMEM).
    @pl.when(b + 1 < nb)
    def _():
        issue_tile(b + 1, (b + 1) % 2)

    slot = b % 2
    # ONE aggregate wait per stream: every row copy on a stream/slot has the
    # same size, so a single wait descriptor sized to the full (TB, D) buffer
    # matches the total signalled bytes.  The wrapper row-pads the tables to
    # >= TB rows, so the sizing slice is always in bounds of the same table
    # the starts used.
    pltpu.make_async_copy(user_hbm.at[pl.ds(0, tb)], u_buf.at[slot],
                          sem.at[0, slot]).wait()
    pltpu.make_async_copy(item_hbm.at[pl.ds(0, tb)], i_buf.at[slot],
                          sem.at[1, slot]).wait()
    pltpu.make_async_copy(item_hbm.at[pl.ds(0, tb)], j_buf.at[slot],
                          sem.at[2, slot]).wait()

    u = u_buf[slot]
    i = i_buf[slot]
    j = j_buf[slot]
    pos_ref[...] = jnp.sum((u * i).astype(jnp.float32), axis=1, keepdims=True)
    neg_ref[...] = jnp.sum((u * j).astype(jnp.float32), axis=1, keepdims=True)


# ---------------------------------------------------------------------------
# Wrapper
# ---------------------------------------------------------------------------
def bpr_forward(batch_user, batch_pos_item, batch_neg_item,
                user_emb, item_emb, *, tb=256, force_hbm_gather=False):
    """BPR forward: returns (pos_score, neg_score), each of shape (B, 1) f32."""
    B = int(batch_user.shape[0])
    NU, D = user_emb.shape
    NI, Di = item_emb.shape
    assert Di == D, "user/item embedding dims must match"

    # Batch tile: multiple of 8 (sublane), clamped so a small batch is one tile.
    tb = max(_UNROLL, min(int(tb), _round_up(B, _UNROLL)))
    tb = _round_up(tb, _UNROLL)
    n_tiles = (B + tb - 1) // tb
    B_pad = n_tiles * tb

    def prep(idx):
        idx = jnp.asarray(idx, jnp.int32).reshape(B)
        return jnp.pad(idx, (0, B_pad - B))          # pad with valid index 0

    u_idx = prep(batch_user)
    p_idx = prep(batch_pos_item)
    n_idx = prep(batch_neg_item)

    # --- choose gather strategy: VMEM-resident tables vs HBM row DMAs -------
    try:
        vmem_cap = int(pltpu.get_tpu_info().vmem_capacity_bytes)
    except Exception:
        vmem_cap = 64 << 20                          # conservative (v7x-sized)
    budget = int(0.70 * vmem_cap)                    # ~45 MiB v7x / ~90 MiB v5e/v6e

    u_isz = user_emb.dtype.itemsize
    i_isz = item_emb.dtype.itemsize

    def resident_bytes(d):
        tables = NU * d * u_isz + NI * d * i_isz
        scratch = tb * d * (u_isz + 2 * i_isz)
        return tables + scratch + (8 << 20)          # outputs/indices/headroom

    D_lane = _round_up(D, 128)
    resident = not force_hbm_gather
    Dp = D
    if resident:
        if resident_bytes(D_lane) <= budget:
            Dp = D_lane          # lane-pad D (zero columns don't change dots)
        elif resident_bytes(D) <= budget:
            Dp = D
        else:
            resident = False

    out_spec = pl.BlockSpec((tb, 1), lambda b, u, p, n: (b, 0))
    out_shape = (jax.ShapeDtypeStruct((B_pad, 1), jnp.float32),
                 jax.ShapeDtypeStruct((B_pad, 1), jnp.float32))
    cost = pl.CostEstimate(
        flops=4 * B_pad * D,
        transcendentals=0,
        bytes_accessed=B_pad * D * (u_isz + 2 * i_isz)
                       + 3 * B_pad * 4 + 2 * B_pad * 4)

    if resident:
        user_t = user_emb if Dp == D else jnp.pad(user_emb, ((0, 0), (0, Dp - D)))
        item_t = item_emb if Dp == D else jnp.pad(item_emb, ((0, 0), (0, Dp - D)))
        kernel = _bpr_resident_kernel
        in_specs = [pl.BlockSpec(memory_space=pltpu.MemorySpace.VMEM),
                    pl.BlockSpec(memory_space=pltpu.MemorySpace.VMEM)]
        scratch_shapes = [pltpu.VMEM((tb, Dp), user_t.dtype),
                          pltpu.VMEM((tb, Dp), item_t.dtype),
                          pltpu.VMEM((tb, Dp), item_t.dtype)]
        vmem_limit = int(max(32 << 20,
                             min(int(0.92 * vmem_cap),
                                 resident_bytes(Dp) + (8 << 20))))
        # Batch tiles are fully independent on this path -> "parallel" shards
        # the grid across v7x's two TensorCores (no-op on v5e/v6e).
        compiler_params = pltpu.CompilerParams(
            dimension_semantics=("parallel",), vmem_limit_bytes=vmem_limit)
    else:
        # TODO(synk): for peak HBM-gather efficiency pad D to a lane multiple
        # (>= 512 B per row DMA) at table-creation time; not done here to avoid
        # rewriting a large table on every forward call.
        # Row-pad tiny tables so the aggregate-wait sizing slice (tb rows) is
        # always in bounds; gathered indices stay < NU/NI so results are
        # unchanged.
        user_t = user_emb if NU >= tb else jnp.pad(user_emb, ((0, tb - NU), (0, 0)))
        item_t = item_emb if NI >= tb else jnp.pad(item_emb, ((0, tb - NI), (0, 0)))
        kernel = _bpr_hbm_kernel
        in_specs = [pl.BlockSpec(memory_space=pl.ANY),
                    pl.BlockSpec(memory_space=pl.ANY)]
        scratch_shapes = [pltpu.VMEM((2, tb, D), user_t.dtype),
                          pltpu.VMEM((2, tb, D), item_t.dtype),
                          pltpu.VMEM((2, tb, D), item_t.dtype),
                          pltpu.SemaphoreType.DMA((3, 2))]
        # Cross-step DMA prefetch carries semaphore/buffer state across grid
        # iterations -> must stay on a single core: keep "arbitrary".
        compiler_params = pltpu.CompilerParams(dimension_semantics=("arbitrary",))

    pos, neg = pl.pallas_call(
        kernel,
        out_shape=out_shape,
        grid_spec=pltpu.PrefetchScalarGridSpec(
            num_scalar_prefetch=3,
            grid=(n_tiles,),
            in_specs=in_specs,
            out_specs=(out_spec, out_spec),
            scratch_shapes=scratch_shapes),
        compiler_params=compiler_params,
        cost_estimate=cost,
    )(u_idx, p_idx, n_idx, user_t, item_t)

    return pos[:B], neg[:B]


if __name__ == "__main__":
    # Small, deterministic problem sizes.  batch=200 exercises pad-to-tile and
    # (with tb=64 / tb=128 below) multi-tile grids on both gather paths.
    num_user, num_item, emb_dim = 64, 128, 32
    batch = 200

    key = jax.random.PRNGKey(0)
    k_ue, k_ie, k_u, k_p, k_n = jax.random.split(key, 5)

    # nn.init.normal_(mean=0.0, std=0.01), float32 (torch default).
    user_emb = 0.01 * jax.random.normal(k_ue, (num_user, emb_dim), dtype=jnp.float32)
    item_emb = 0.01 * jax.random.normal(k_ie, (num_item, emb_dim), dtype=jnp.float32)

    batch_user = jax.random.randint(k_u, (batch,), 0, num_user, dtype=jnp.int32)
    batch_pos = jax.random.randint(k_p, (batch,), 0, num_item, dtype=jnp.int32)
    batch_neg = jax.random.randint(k_n, (batch,), 0, num_item, dtype=jnp.int32)

    # Pure-JAX reference (mirrors the PyTorch forward exactly).
    u = jnp.take(user_emb, batch_user, axis=0)
    i = jnp.take(item_emb, batch_pos, axis=0)
    j = jnp.take(item_emb, batch_neg, axis=0)
    pos_ref = jnp.sum(u * i, axis=1, keepdims=True)
    neg_ref = jnp.sum(u * j, axis=1, keepdims=True)

    # 1) Resident-table path, single tile (default tb clamps to the batch).
    pos1, neg1 = bpr_forward(batch_user, batch_pos, batch_neg, user_emb, item_emb)
    # 2) Resident-table path, multi-tile grid ("parallel" semantics).
    pos2, neg2 = bpr_forward(batch_user, batch_pos, batch_neg, user_emb, item_emb,
                             tb=64)
    # 3) Forced HBM-gather path: double-buffered row DMAs + aggregate waits.
    pos3, neg3 = bpr_forward(batch_user, batch_pos, batch_neg, user_emb, item_emb,
                             tb=128, force_hbm_gather=True)
    jax.block_until_ready((pos1, neg1, pos2, neg2, pos3, neg3))

    for p, n in ((pos1, neg1), (pos2, neg2), (pos3, neg3)):
        assert p.shape == (batch, 1) and n.shape == (batch, 1)
        assert jnp.allclose(p, pos_ref, rtol=1e-5, atol=1e-7)
        assert jnp.allclose(n, neg_ref, rtol=1e-5, atol=1e-7)

    print("KERNEL_OK")
</pallas_src>

<mosaic_0001>
module attributes {stable_mosaic.version = 11 : i64} {
  func.func @_bpr_resident_kernel(%arg0: i32, %arg1: memref<200xi32, #tpu.memory_space<smem>>, %arg2: memref<200xi32, #tpu.memory_space<smem>>, %arg3: memref<200xi32, #tpu.memory_space<smem>>, %arg4: memref<64x128xf32, #tpu.memory_space<vmem>>, %arg5: memref<128x128xf32, #tpu.memory_space<vmem>>, %arg6: memref<200x1xf32, #tpu.memory_space<vmem>>, %arg7: memref<200x1xf32, #tpu.memory_space<vmem>>, %arg8: memref<200x128xf32, #tpu.memory_space<vmem>>, %arg9: memref<200x128xf32, #tpu.memory_space<vmem>>, %arg10: memref<200x128xf32, #tpu.memory_space<vmem>>) attributes {dimension_semantics = [#tpu.dimension_semantics<parallel>], iteration_bounds = array<i64: 1>, scalar_prefetch = 3 : i64, scratch_operands = 3 : i64, tpu.core_type = #tpu.core_type<tc>, window_params = [{pipeline_mode = #tpu.pipeline_mode<synchronous>, transform_indices = @transform_0, window_bounds = array<i64: 64, 128>}, {pipeline_mode = #tpu.pipeline_mode<synchronous>, transform_indices = @transform_1, window_bounds = array<i64: 128, 128>}, {transform_indices = @transform_2, window_bounds = array<i64: 200, 1>}, {transform_indices = @transform_3, window_bounds = array<i64: 200, 1>}]} {
    %c200_i32 = arith.constant 200 : i32
    %0 = arith.muli %arg0, %c200_i32 : i32
    %c0_i32 = arith.constant 0 : i32
    %c25_i32 = arith.constant 25 : i32
    %1 = arith.addi %c0_i32, %c25_i32 : i32
    %c1_i32 = arith.constant 1 : i32
    scf.for %arg11 = %c0_i32 to %1 step %c1_i32  : i32 {
      %c8_i32 = arith.constant 8 : i32
      %13 = arith.muli %arg11, %c8_i32 : i32
      %14 = tpu.assume_multiple %13, 8 : i32
      %15 = arith.addi %0, %14 : i32
      %c0_i32_11 = arith.constant 0 : i32
      %16 = arith.addi %15, %c0_i32_11 : i32
      %17 = arith.index_cast %16 : i32 to index
      %18 = memref.load %arg1[%17] : memref<200xi32, #tpu.memory_space<smem>>
      %19 = arith.addi %0, %14 : i32
      %c0_i32_12 = arith.constant 0 : i32
      %20 = arith.addi %19, %c0_i32_12 : i32
      %21 = arith.index_cast %20 : i32 to index
      %22 = memref.load %arg2[%21] : memref<200xi32, #tpu.memory_space<smem>>
      %23 = arith.addi %0, %14 : i32
      %c0_i32_13 = arith.constant 0 : i32
      %24 = arith.addi %23, %c0_i32_13 : i32
      %25 = arith.index_cast %24 : i32 to index
      %26 = memref.load %arg3[%25] : memref<200xi32, #tpu.memory_space<smem>>
      %27 = arith.index_cast %18 : i32 to index
      %c0_14 = arith.constant 0 : index
      %28 = vector.load %arg4[%27, %c0_14] : memref<64x128xf32, #tpu.memory_space<vmem>>, vector<1x128xf32>
      %29 = arith.index_cast %22 : i32 to index
      %c0_15 = arith.constant 0 : index
      %30 = vector.load %arg5[%29, %c0_15] : memref<128x128xf32, #tpu.memory_space<vmem>>, vector<1x128xf32>
      %31 = arith.index_cast %26 : i32 to index
      %c0_16 = arith.constant 0 : index
      %32 = vector.load %arg5[%31, %c0_16] : memref<128x128xf32, #tpu.memory_space<vmem>>, vector<1x128xf32>
      %33 = arith.addi %0, %14 : i32
      %c1_i32_17 = arith.constant 1 : i32
      %34 = arith.addi %33, %c1_i32_17 : i32
      %35 = arith.index_cast %34 : i32 to index
      %36 = memref.load %arg1[%35] : memref<200xi32, #tpu.memory_space<smem>>
      %37 = arith.addi %0, %14 : i32
      %c1_i32_18 = arith.constant 1 : i32
      %38 = arith.addi %37, %c1_i32_18 : i32
      %39 = arith.index_cast %38 : i32 to index
      %40 = memref.load %arg2[%39] : memref<200xi32, #tpu.memory_space<smem>>
      %41 = arith.addi %0, %14 : i32
      %c1_i32_19 = arith.constant 1 : i32
      %42 = arith.addi %41, %c1_i32_19 : i32
      %43 = arith.index_cast %42 : i32 to index
      %44 = memref.load %arg3[%43] : memref<200xi32, #tpu.memory_space<smem>>
      %45 = arith.index_cast %36 : i32 to index
      %c0_20 = arith.constant 0 : index
      %46 = vector.load %arg4[%45, %c0_20] : memref<64x128xf32, #tpu.memory_space<vmem>>, vector<1x128xf32>
      %47 = arith.index_cast %40 : i32 to index
      %c0_21 = arith.constant 0 : index
      %48 = vector.load %arg5[%47, %c0_21] : memref<128x128xf32, #tpu.memory_space<vmem>>, vector<1x128xf32>
      %49 = arith.index_cast %44 : i32 to index
      %c0_22 = arith.constant 0 : index
      %50 = vector.load %arg5[%49, %c0_22] : memref<128x128xf32, #tpu.memory_space<vmem>>, vector<1x128xf32>
      %51 = arith.addi %0, %14 : i32
      %c2_i32 = arith.constant 2 : i32
      %52 = arith.addi %51, %c2_i32 : i32
      %53 = arith.index_cast %52 : i32 to index
      %54 = memref.load %arg1[%53] : memref<200xi32, #tpu.memory_space<smem>>
      %55 = arith.addi %0, %14 : i32
      %c2_i32_23 = arith.constant 2 : i32
      %56 = arith.addi %55, %c2_i32_23 : i32
      %57 = arith.index_cast %56 : i32 to index
      %58 = memref.load %arg2[%57] : memref<200xi32, #tpu.memory_space<smem>>
      %59 = arith.addi %0, %14 : i32
      %c2_i32_24 = arith.constant 2 : i32
      %60 = arith.addi %59, %c2_i32_24 : i32
      %61 = arith.index_cast %60 : i32 to index
      %62 = memref.load %arg3[%61] : memref<200xi32, #tpu.memory_space<smem>>
      %63 = arith.index_cast %54 : i32 to index
      %c0_25 = arith.constant 0 : index
      %64 = vector.load %arg4[%63, %c0_25] : memref<64x128xf32, #tpu.memory_space<vmem>>, vector<1x128xf32>
      %65 = arith.index_cast %58 : i32 to index
      %c0_26 = arith.constant 0 : index
      %66 = vector.load %arg5[%65, %c0_26] : memref<128x128xf32, #tpu.memory_space<vmem>>, vector<1x128xf32>
      %67 = arith.index_cast %62 : i32 to index
      %c0_27 = arith.constant 0 : index
      %68 = vector.load %arg5[%67, %c0_27] : memref<128x128xf32, #tpu.memory_space<vmem>>, vector<1x128xf32>
      %69 = arith.addi %0, %14 : i32
      %c3_i32 = arith.constant 3 : i32
      %70 = arith.addi %69, %c3_i32 : i32
      %71 = arith.index_cast %70 : i32 to index
      %72 = memref.load %arg1[%71] : memref<200xi32, #tpu.memory_space<smem>>
      %73 = arith.addi %0, %14 : i32
      %c3_i32_28 = arith.constant 3 : i32
      %74 = arith.addi %73, %c3_i32_28 : i32
      %75 = arith.index_cast %74 : i32 to index
      %76 = memref.load %arg2[%75] : memref<200xi32, #tpu.memory_space<smem>>
      %77 = arith.addi %0, %14 : i32
      %c3_i32_29 = arith.constant 3 : i32
      %78 = arith.addi %77, %c3_i32_29 : i32
      %79 = arith.index_cast %78 : i32 to index
      %80 = memref.load %arg3[%79] : memref<200xi32, #tpu.memory_space<smem>>
      %81 = arith.index_cast %72 : i32 to index
      %c0_30 = arith.constant 0 : index
      %82 = vector.load %arg4[%81, %c0_30] : memref<64x128xf32, #tpu.memory_space<vmem>>, vector<1x128xf32>
      %83 = arith.index_cast %76 : i32 to index
      %c0_31 = arith.constant 0 : index
      %84 = vector.load %arg5[%83, %c0_31] : memref<128x128xf32, #tpu.memory_space<vmem>>, vector<1x128xf32>
      %85 = arith.index_cast %80 : i32 to index
      %c0_32 = arith.constant 0 : index
      %86 = vector.load %arg5[%85, %c0_32] : memref<128x128xf32, #tpu.memory_space<vmem>>, vector<1x128xf32>
      %87 = arith.addi %0, %14 : i32
      %c4_i32 = arith.constant 4 : i32
      %88 = arith.addi %87, %c4_i32 : i32
      %89 = arith.index_cast %88 : i32 to index
      %90 = memref.load %arg1[%89] : memref<200xi32, #tpu.memory_space<smem>>
      %91 = arith.addi %0, %14 : i32
      %c4_i32_33 = arith.constant 4 : i32
      %92 = arith.addi %91, %c4_i32_33 : i32
      %93 = arith.index_cast %92 : i32 to index
      %94 = memref.load %arg2[%93] : memref<200xi32, #tpu.memory_space<smem>>
      %95 = arith.addi %0, %14 : i32
      %c4_i32_34 = arith.constant 4 : i32
      %96 = arith.addi %95, %c4_i32_34 : i32
      %97 = arith.index_cast %96 : i32 to index
      %98 = memref.load %arg3[%97] : memref<200xi32, #tpu.memory_space<smem>>
      %99 = arith.index_cast %90 : i32 to index
      %c0_35 = arith.constant 0 : index
      %100 = vector.load %arg4[%99, %c0_35] : memref<64x128xf32, #tpu.memory_space<vmem>>, vector<1x128xf32>
      %101 = arith.index_cast %94 : i32 to index
      %c0_36 = arith.constant 0 : index
      %102 = vector.load %arg5[%101, %c0_36] : memref<128x128xf32, #tpu.memory_space<vmem>>, vector<1x128xf32>
      %103 = arith.index_cast %98 : i32 to index
      %c0_37 = arith.constant 0 : index
      %104 = vector.load %arg5[%103, %c0_37] : memref<128x128xf32, #tpu.memory_space<vmem>>, vector<1x128xf32>
      %105 = arith.addi %0, %14 : i32
      %c5_i32 = arith.constant 5 : i32
      %106 = arith.addi %105, %c5_i32 : i32
      %107 = arith.index_cast %106 : i32 to index
      %108 = memref.load %arg1[%107] : memref<200xi32, #tpu.memory_space<smem>>
      %109 = arith.addi %0, %14 : i32
      %c5_i32_38 = arith.constant 5 : i32
      %110 = arith.addi %109, %c5_i32_38 : i32
      %111 = arith.index_cast %110 : i32 to index
      %112 = memref.load %arg2[%111] : memref<200xi32, #tpu.memory_space<smem>>
      %113 = arith.addi %0, %14 : i32
      %c5_i32_39 = arith.constant 5 : i32
      %114 = arith.addi %113, %c5_i32_39 : i32
      %115 = arith.index_cast %114 : i32 to index
      %116 = memref.load %arg3[%115] : memref<200xi32, #tpu.memory_space<smem>>
      %117 = arith.index_cast %108 : i32 to index
      %c0_40 = arith.constant 0 : index
      %118 = vector.load %arg4[%117, %c0_40] : memref<64x128xf32, #tpu.memory_space<vmem>>, vector<1x128xf32>
      %119 = arith.index_cast %112 : i32 to index
      %c0_41 = arith.constant 0 : index
      %120 = vector.load %arg5[%119, %c0_41] : memref<128x128xf32, #tpu.memory_space<vmem>>, vector<1x128xf32>
      %121 = arith.index_cast %116 : i32 to index
      %c0_42 = arith.constant 0 : index
      %122 = vector.load %arg5[%121, %c0_42] : memref<128x128xf32, #tpu.memory_space<vmem>>, vector<1x128xf32>
      %123 = arith.addi %0, %14 : i32
      %c6_i32 = arith.constant 6 : i32
      %124 = arith.addi %123, %c6_i32 : i32
      %125 = arith.index_cast %124 : i32 to index
      %126 = memref.load %arg1[%125] : memref<200xi32, #tpu.memory_space<smem>>
      %127 = arith.addi %0, %14 : i32
      %c6_i32_43 = arith.constant 6 : i32
      %128 = arith.addi %127, %c6_i32_43 : i32
      %129 = arith.index_cast %128 : i32 to index
      %130 = memref.load %arg2[%129] : memref<200xi32, #tpu.memory_space<smem>>
      %131 = arith.addi %0, %14 : i32
      %c6_i32_44 = arith.constant 6 : i32
      %132 = arith.addi %131, %c6_i32_44 : i32
      %133 = arith.index_cast %132 : i32 to index
      %134 = memref.load %arg3[%133] : memref<200xi32, #tpu.memory_space<smem>>
      %135 = arith.index_cast %126 : i32 to index
      %c0_45 = arith.constant 0 : index
      %136 = vector.load %arg4[%135, %c0_45] : memref<64x128xf32, #tpu.memory_space<vmem>>, vector<1x128xf32>
      %137 = arith.index_cast %130 : i32 to index
      %c0_46 = arith.constant 0 : index
      %138 = vector.load %arg5[%137, %c0_46] : memref<128x128xf32, #tpu.memory_space<vmem>>, vector<1x128xf32>
      %139 = arith.index_cast %134 : i32 to index
      %c0_47 = arith.constant 0 : index
      %140 = vector.load %arg5[%139, %c0_47] : memref<128x128xf32, #tpu.memory_space<vmem>>, vector<1x128xf32>
      %141 = arith.addi %0, %14 : i32
      %c7_i32 = arith.constant 7 : i32
      %142 = arith.addi %141, %c7_i32 : i32
      %143 = arith.index_cast %142 : i32 to index
      %144 = memref.load %arg1[%143] : memref<200xi32, #tpu.memory_space<smem>>
      %145 = arith.addi %0, %14 : i32
      %c7_i32_48 = arith.constant 7 : i32
      %146 = arith.addi %145, %c7_i32_48 : i32
      %147 = arith.index_cast %146 : i32 to index
      %148 = memref.load %arg2[%147] : memref<200xi32, #tpu.memory_space<smem>>
      %149 = arith.addi %0, %14 : i32
      %c7_i32_49 = arith.constant 7 : i32
      %150 = arith.addi %149, %c7_i32_49 : i32
      %151 = arith.index_cast %150 : i32 to index
      %152 = memref.load %arg3[%151] : memref<200xi32, #tpu.memory_space<smem>>
      %153 = arith.index_cast %144 : i32 to index
      %c0_50 = arith.constant 0 : index
      %154 = vector.load %arg4[%153, %c0_50] : memref<64x128xf32, #tpu.memory_space<vmem>>, vector<1x128xf32>
      %155 = arith.index_cast %148 : i32 to index
      %c0_51 = arith.constant 0 : index
      %156 = vector.load %arg5[%155, %c0_51] : memref<128x128xf32, #tpu.memory_space<vmem>>, vector<1x128xf32>
      %157 = arith.index_cast %152 : i32 to index
      %c0_52 = arith.constant 0 : index
      %158 = vector.load %arg5[%157, %c0_52] : memref<128x128xf32, #tpu.memory_space<vmem>>, vector<1x128xf32>
      %159 = tpu.concatenate %28, %46, %64, %82, %100, %118, %136, %154 in 0 : vector<1x128xf32>, vector<1x128xf32>, vector<1x128xf32>, vector<1x128xf32>, vector<1x128xf32>, vector<1x128xf32>, vector<1x128xf32>, vector<1x128xf32> -> vector<8x128xf32>
      %160 = arith.index_cast %14 : i32 to index
      %c0_53 = arith.constant 0 : index
      %161 = vector.load %arg8[%160, %c0_53] : memref<200x128xf32, #tpu.memory_space<vmem>>, vector<8x128xf32>
      tpu.vector_store %arg8[%160, %c0_53], %159 {strides = array<i32>} : memref<200x128xf32, #tpu.memory_space<vmem>>, vector<8x128xf32>,
      %162 = tpu.concatenate %30, %48, %66, %84, %102, %120, %138, %156 in 0 : vector<1x128xf32>, vector<1x128xf32>, vector<1x128xf32>, vector<1x128xf32>, vector<1x128xf32>, vector<1x128xf32>, vector<1x128xf32>, vector<1x128xf32> -> vector<8x128xf32>
      %163 = arith.index_cast %14 : i32 to index
      %c0_54 = arith.constant 0 : index
      %164 = vector.load %arg9[%163, %c0_54] : memref<200x128xf32, #tpu.memory_space<vmem>>, vector<8x128xf32>
      tpu.vector_store %arg9[%163, %c0_54], %162 {strides = array<i32>} : memref<200x128xf32, #tpu.memory_space<vmem>>, vector<8x128xf32>,
      %165 = tpu.concatenate %32, %50, %68, %86, %104, %122, %140, %158 in 0 : vector<1x128xf32>, vector<1x128xf32>, vector<1x128xf32>, vector<1x128xf32>, vector<1x128xf32>, vector<1x128xf32>, vector<1x128xf32>, vector<1x128xf32> -> vector<8x128xf32>
      %166 = arith.index_cast %14 : i32 to index
      %c0_55 = arith.constant 0 : index
      %167 = vector.load %arg10[%166, %c0_55] : memref<200x128xf32, #tpu.memory_space<vmem>>, vector<8x128xf32>
      tpu.vector_store %arg10[%166, %c0_55], %165 {strides = array<i32>} : memref<200x128xf32, #tpu.memory_space<vmem>>, vector<8x128xf32>,
    }
    %c25_i32_0 = arith.constant 25 : i32
    %c0 = arith.constant 0 : index
    %c0_1 = arith.constant 0 : index
    %2 = vector.load %arg8[%c0, %c0_1] : memref<200x128xf32, #tpu.memory_space<vmem>>, vector<200x128xf32>
    %c0_2 = arith.constant 0 : index
    %c0_3 = arith.constant 0 : index
    %3 = vector.load %arg9[%c0_2, %c0_3] : memref<200x128xf32, #tpu.memory_space<vmem>>, vector<200x128xf32>
    %c0_4 = arith.constant 0 : index
    %c0_5 = arith.constant 0 : index
    %4 = vector.load %arg10[%c0_4, %c0_5] : memref<200x128xf32, #tpu.memory_space<vmem>>, vector<200x128xf32>
    %5 = arith.mulf %2, %3 : vector<200x128xf32>
    %cst = arith.constant dense<0.000000e+00> : vector<200xf32>
    %6 = vector.multi_reduction <add>, %5, %cst [1] : vector<200x128xf32> to vector<200xf32>
    %7 = vector.shape_cast %6 : vector<200xf32> to vector<200x1xf32>
    %c0_6 = arith.constant 0 : index
    %c0_7 = arith.constant 0 : index
    %8 = vector.load %arg6[%c0_6, %c0_7] : memref<200x1xf32, #tpu.memory_space<vmem>>, vector<200x1xf32>
    tpu.vector_store %arg6[%c0_6, %c0_7], %7 {strides = array<i32>} : memref<200x1xf32, #tpu.memory_space<vmem>>, vector<200x1xf32>,
    %9 = arith.mulf %2, %4 : vector<200x128xf32>
    %cst_8 = arith.constant dense<0.000000e+00> : vector<200xf32>
    %10 = vector.multi_reduction <add>, %9, %cst_8 [1] : vector<200x128xf32> to vector<200xf32>
    %11 = vector.shape_cast %10 : vector<200xf32> to vector<200x1xf32>
    %c0_9 = arith.constant 0 : index
    %c0_10 = arith.constant 0 : index
    %12 = vector.load %arg7[%c0_9, %c0_10] : memref<200x1xf32, #tpu.memory_space<vmem>>, vector<200x1xf32>
    tpu.vector_store %arg7[%c0_9, %c0_10], %11 {strides = array<i32>} : memref<200x1xf32, #tpu.memory_space<vmem>>, vector<200x1xf32>,
    return
  }
  func.func @transform_0(%arg0: i32, %arg1: memref<200xi32, #tpu.memory_space<smem>>, %arg2: memref<200xi32, #tpu.memory_space<smem>>, %arg3: memref<200xi32, #tpu.memory_space<smem>>) -> (i32, i32) {
    %c0_i32 = arith.constant 0 : i32
    %c0_i32_0 = arith.constant 0 : i32
    %c0_i32_1 = arith.constant 0 : i32
    return %c0_i32, %c0_i32_0 : i32, i32
  }
  func.func @transform_1(%arg0: i32, %arg1: memref<200xi32, #tpu.memory_space<smem>>, %arg2: memref<200xi32, #tpu.memory_space<smem>>, %arg3: memref<200xi32, #tpu.memory_space<smem>>) -> (i32, i32) {
    %c0_i32 = arith.constant 0 : i32
    %c0_i32_0 = arith.constant 0 : i32
    %c0_i32_1 = arith.constant 0 : i32
    return %c0_i32, %c0_i32_0 : i32, i32
  }
  func.func @transform_2(%arg0: i32, %arg1: memref<200xi32, #tpu.memory_space<smem>>, %arg2: memref<200xi32, #tpu.memory_space<smem>>, %arg3: memref<200xi32, #tpu.memory_space<smem>>) -> (i32, i32) {
    %c0_i32 = arith.constant 0 : i32
    %c0_i32_0 = arith.constant 0 : i32
    return %arg0, %c0_i32 : i32, i32
  }
  func.func @transform_3(%arg0: i32, %arg1: memref<200xi32, #tpu.memory_space<smem>>, %arg2: memref<200xi32, #tpu.memory_space<smem>>, %arg3: memref<200xi32, #tpu.memory_space<smem>>) -> (i32, i32) {
    %c0_i32 = arith.constant 0 : i32
    %c0_i32_0 = arith.constant 0 : i32
    return %arg0, %c0_i32 : i32, i32
  }
}

</mosaic_0001>

<llo_original>
// kernel: tpu_custom_call.1
$region0: #{tpu_custom_call.1}
  #allocation0 [shape = 'u32[]', space=smem, size = 0x4, offset = 0x4, fixed_abs, tag = 'smem constant byte address 0x4 - core index']
  #allocation1 [shape = 'u32[72,128]{1,0:T(1,128)}', space=vmem, size = 0x9000, scoped, tag = 'internal scratch']
  #allocation2 [shape = 'f32[200,128]{1,0:T(8,128)}', space=vmem, size = 0x19000, scoped, tag = 'scratch operand']
  #allocation3 [shape = 'f32[200,128]{1,0:T(8,128)}', space=vmem, size = 0x19000, scoped, tag = 'scratch operand']
  #allocation4 [shape = 'f32[200,128]{1,0:T(8,128)}', space=vmem, size = 0x19000, scoped, tag = 'scratch operand']
  #allocation5 [shape = 's32[1]{0}', space=sflag, size = 0x4, scoped, tag = 'scoped memory for tpu_custom_call.1']
  #allocation6 [shape = 'u8[1024]{0}', space=smem, size = 0x400, scoped, tag = 'prefetched SMEM operand 0']
  #allocation7 [shape = 'u8[1024]{0}', space=smem, size = 0x400, scoped, tag = 'prefetched SMEM operand 1']
  #allocation8 [shape = 'u8[1024]{0}', space=smem, size = 0x400, scoped, tag = 'prefetched SMEM operand 2']
  %s0 = inlined_call_operand.hbm [shape: s32[200], index: 0, kind: input, shape index: {}]
  %s1 = inlined_call_operand.hbm [shape: s32[200], index: 1, kind: input, shape index: {}]
  %s2 = inlined_call_operand.hbm [shape: s32[200], index: 2, kind: input, shape index: {}]
  %s3 = inlined_call_operand.hbm [shape: f32[64,128], index: 3, kind: input, shape index: {}]
  %s4 = inlined_call_operand.hbm [shape: f32[128,128], index: 4, kind: input, shape index: {}]
  %s5 = inlined_call_operand.vmem [shape: f32[200,1], index: 5, kind: output, shape index: {0}]
  %s6 = inlined_call_operand.vmem [shape: f32[200,1], index: 6, kind: output, shape index: {1}]
  %7 = xla_tuple %s5, %s6
  %s8 = sld [smem:[#allocation0]]
  $region41: #{tpu_custom_call.1} parent=0
    _
  %s10 = ssub.s32 1, %s8
  %s11 = scalar_select 0, %s10, %s8
  %s13 = sshll.u32 %s0, 4
  %s14 = int_to_ptr.hbm [resolvable:$true] %s13
  %16 = dma.hbm_to_smem %s14, 32, [#allocation6], [#allocation5]
  %s18 = sshll.u32 %s1, 4
  %s19 = int_to_ptr.hbm [resolvable:$true] %s18
  %21 = dma.hbm_to_smem %s19, 32, [#allocation7], [#allocation5]
  %s23 = sshll.u32 %s2, 4
  %s24 = int_to_ptr.hbm [resolvable:$true] %s23
  %26 = dma.hbm_to_smem %s24, 32, [#allocation8], [#allocation5]
  %28 = dma.done [#allocation5], 96
  %29 = sfence
  $region1: #{tpu_custom_call.1} parent=0
    #allocation9 [shape = 'u8[32768]{0}', space=vmem, size = 0x8000, scoped, tag = 'input window, operand 3, single buffered']
    #allocation10 [shape = 's32[1]{0}', space=sflag, size = 0x4, scoped, tag = 'scoped memory for tpu_custom_call.1']
    #allocation11 [shape = 'u8[65536]{0}', space=vmem, size = 0x10000, scoped, tag = 'input window, operand 4, single buffered']
    #allocation12 [shape = 's32[1]{0}', space=sflag, size = 0x4, scoped, tag = 'scoped memory for tpu_custom_call.1']
    %30 = vsyncpa [#allocation10], 0
    %31 = vsyncpa [#allocation12], 0
    // Predicated region
    $region2: #{tpu_custom_call.1} parent=1 // pred_check
      _
    $region3: #{tpu_custom_call.1} parent=1 // pred_check_branch
      %33 = sbr.rel (0) target = $region5
    $region4: #{tpu_custom_call.1} parent=1 // pred_region
      %35 = vsyncadd [#allocation10], 0
      %s36 = sshll.u32 %s3, 4
      %s37 = int_to_ptr.hbm [resolvable:$true] %s36
      %s38 = sshll.u32 [#allocation9], 4
      %s39 = int_to_ptr.vmem [resolvable:$true] %s38
      %44 = dma.hbm_to_vmem [thread:$0]  %s37, 1024, %s39, [#allocation10], 128, 128, 8
    $region5: #{tpu_custom_call.1} parent=1 // pred_fallthru
      _
    // Predicated region
    $region6: #{tpu_custom_call.1} parent=1 // pred_check
      _
    $region7: #{tpu_custom_call.1} parent=1 // pred_check_branch
      %46 = sbr.rel (0) target = $region9
    $region8: #{tpu_custom_call.1} parent=1 // pred_region
      %48 = vsyncadd [#allocation12], 0
      %s49 = sshll.u32 %s4, 4
      %s50 = int_to_ptr.hbm [resolvable:$true] %s49
      %s51 = sshll.u32 [#allocation11], 4
      %s52 = int_to_ptr.vmem [resolvable:$true] %s51
      %57 = dma.hbm_to_vmem [thread:$0]  %s50, 2048, %s52, [#allocation12], 128, 128, 8
    $region9: #{tpu_custom_call.1} parent=1 // pred_fallthru
      _
    // Predicated region
    $region10: #{tpu_custom_call.1} parent=1 // pred_check
      _
    $region11: #{tpu_custom_call.1} parent=1 // pred_check_branch
      %59 = sbr.rel (0) target = $region13
    $region12: #{tpu_custom_call.1} parent=1 // pred_region
      %61 = dma.done [#allocation10], 1024
    $region13: #{tpu_custom_call.1} parent=1 // pred_fallthru
      _
    // Predicated region
    $region14: #{tpu_custom_call.1} parent=1 // pred_check
      _
    $region15: #{tpu_custom_call.1} parent=1 // pred_check_branch
      %63 = sbr.rel (0) target = $region17
    $region16: #{tpu_custom_call.1} parent=1 // pred_region
      %65 = dma.done [#allocation12], 2048
    $region17: #{tpu_custom_call.1} parent=1 // pred_fallthru
      _
    %s66 = smul.u32 0, 200
    loop: start=0, step=1, limit=25
    $region18: #{tpu_custom_call.1} parent=1 // loop_pre_header
      _
    $region19: #{tpu_custom_call.1} parent=1 // loop_header
      %s68 = sphi 0, %s72
      %p69 = scmp.ge.s32.totalorder %s68, 25
    $region20: #{tpu_custom_call.1} parent=1 // loop_header_branch
      %71 = sbr.rel (%p69) target = $region24
    $region21: #{tpu_custom_call.1} parent=1 // loop_body
      %s73 = smul.u32 %s68, 8
      %s74 = sadd.s32 %s66, %s73
      %s75 = sld [smem:[#allocation6 + %s74]]
      %s76 = sld [smem:[#allocation7 + %s74]]
      %s77 = sld [smem:[#allocation8 + %s74]]
      %s78 = scalar_lea.vmem [#allocation9], %s75
      %v79 = vld [vmem:[%s78] sm:$0x1]
      %s80 = scalar_lea.vmem [#allocation11], %s76
      %v81 = vld [vmem:[%s80] sm:$0x1]
      %s82 = scalar_lea.vmem [#allocation11], %s77
      %v83 = vld [vmem:[%s82] sm:$0x1]
      %s84 = sadd.s32 %s74, 1
      %s85 = sld [smem:[#allocation6 + %s84]]
      %s86 = sld [smem:[#allocation7 + %s84]]
      %s87 = sld [smem:[#allocation8 + %s84]]
      %s88 = scalar_lea.vmem [#allocation9], %s85
      %v89 = vld [vmem:[%s88] sm:$0x1]
      %s90 = scalar_lea.vmem [#allocation11], %s86
      %v91 = vld [vmem:[%s90] sm:$0x1]
      %s92 = scalar_lea.vmem [#allocation11], %s87
      %v93 = vld [vmem:[%s92] sm:$0x1]
      %s94 = sadd.s32 %s74, 2
      %s95 = sld [smem:[#allocation6 + %s94]]
      %s96 = sld [smem:[#allocation7 + %s94]]
      %s97 = sld [smem:[#allocation8 + %s94]]
      %s98 = scalar_lea.vmem [#allocation9], %s95
      %v99 = vld [vmem:[%s98] sm:$0x1]
      %s100 = scalar_lea.vmem [#allocation11], %s96
      %v101 = vld [vmem:[%s100] sm:$0x1]
      %s102 = scalar_lea.vmem [#allocation11], %s97
      %v103 = vld [vmem:[%s102] sm:$0x1]
      %s104 = sadd.s32 %s74, 3
      %s105 = sld [smem:[#allocation6 + %s104]]
      %s106 = sld [smem:[#allocation7 + %s104]]
      %s107 = sld [smem:[#allocation8 + %s104]]
      %s108 = scalar_lea.vmem [#allocation9], %s105
      %v109 = vld [vmem:[%s108] sm:$0x1]
      %s110 = scalar_lea.vmem [#allocation11], %s106
      %v111 = vld [vmem:[%s110] sm:$0x1]
      %s112 = scalar_lea.vmem [#allocation11], %s107
      %v113 = vld [vmem:[%s112] sm:$0x1]
      %s114 = sadd.s32 %s74, 4
      %s115 = sld [smem:[#allocation6 + %s114]]
      %s116 = sld [smem:[#allocation7 + %s114]]
      %s117 = sld [smem:[#allocation8 + %s114]]
      %s118 = scalar_lea.vmem [#allocation9], %s115
      %v119 = vld [vmem:[%s118] sm:$0x1]
      %s120 = scalar_lea.vmem [#allocation11], %s116
      %v121 = vld [vmem:[%s120] sm:$0x1]
      %s122 = scalar_lea.vmem [#allocation11], %s117
      %v123 = vld [vmem:[%s122] sm:$0x1]
      %s124 = sadd.s32 %s74, 5
      %s125 = sld [smem:[#allocation6 + %s124]]
      %s126 = sld [smem:[#allocation7 + %s124]]
      %s127 = sld [smem:[#allocation8 + %s124]]
      %s128 = scalar_lea.vmem [#allocation9], %s125
      %v129 = vld [vmem:[%s128] sm:$0x1]
      %s130 = scalar_lea.vmem [#allocation11], %s126
      %v131 = vld [vmem:[%s130] sm:$0x1]
      %s132 = scalar_lea.vmem [#allocation11], %s127
      %v133 = vld [vmem:[%s132] sm:$0x1]
      %s134 = sadd.s32 %s74, 6
      %s135 = sld [smem:[#allocation6 + %s134]]
      %s136 = sld [smem:[#allocation7 + %s134]]
      %s137 = sld [smem:[#allocation8 + %s134]]
      %s138 = scalar_lea.vmem [#allocation9], %s135
      %v139 = vld [vmem:[%s138] sm:$0x1]
      %s140 = scalar_lea.vmem [#allocation11], %s136
      %v141 = vld [vmem:[%s140] sm:$0x1]
      %s142 = scalar_lea.vmem [#allocation11], %s137
      %v143 = vld [vmem:[%s142] sm:$0x1]
      %s144 = sadd.s32 %s74, 7
      %s145 = sld [smem:[#allocation6 + %s144]]
      %s146 = sld [smem:[#allocation7 + %s144]]
      %s147 = sld [smem:[#allocation8 + %s144]]
      %s148 = scalar_lea.vmem [#allocation9], %s145
      %v149 = vld [vmem:[%s148] sm:$0x1]
      %s150 = scalar_lea.vmem [#allocation11], %s146
      %v151 = vld [vmem:[%s150] sm:$0x1]
      %s152 = scalar_lea.vmem [#allocation11], %s147
      %v153 = vld [vmem:[%s152] sm:$0x1]
      %v155 = vrot.slane %v89, 7
      %v158 = vrot.slane %v99, 6
      %v161 = vrot.slane %v109, 5
      %v164 = vrot.slane %v119, 4
      %v167 = vrot.slane %v129, 3
      %v170 = vrot.slane %v139, 2
      %v173 = vrot.slane %v149, 1
      %vm175 = vcmask 1040384
      %v176 = vsel %vm175, %v79, %v155
      %vm177 = vcmask 1041408
      %v178 = vsel %vm177, %v176, %v158
      %vm179 = vcmask 1042432
      %v180 = vsel %vm179, %v178, %v161
      %vm181 = vcmask 1043456
      %v182 = vsel %vm181, %v180, %v164
      %vm183 = vcmask 1044480
      %v184 = vsel %vm183, %v182, %v167
      %vm185 = vcmask 1045504
      %v186 = vsel %vm185, %v184, %v170
      %vm187 = vcmask 1046528
      %v188 = vsel %vm187, %v186, %v173
      %s189 = scalar_lea.vmem [#allocation2], %s73
      %190 = vst [vmem:[%s189] sm:$0xff] %v188
      %v192 = vrot.slane %v91, 7
      %v195 = vrot.slane %v101, 6
      %v198 = vrot.slane %v111, 5
      %v201 = vrot.slane %v121, 4
      %v204 = vrot.slane %v131, 3
      %v207 = vrot.slane %v141, 2
      %v210 = vrot.slane %v151, 1
      %v212 = vsel %vm175, %v81, %v192
      %v213 = vsel %vm177, %v212, %v195
      %v214 = vsel %vm179, %v213, %v198
      %v215 = vsel %vm181, %v214, %v201
      %v216 = vsel %vm183, %v215, %v204
      %v217 = vsel %vm185, %v216, %v207
      %v218 = vsel %vm187, %v217, %v210
      %s219 = scalar_lea.vmem [#allocation3], %s73
      %220 = vst [vmem:[%s219] sm:$0xff] %v218
      %v222 = vrot.slane %v93, 7
      %v225 = vrot.slane %v103, 6
      %v228 = vrot.slane %v113, 5
      %v231 = vrot.slane %v123, 4
      %v234 = vrot.slane %v133, 3
      %v237 = vrot.slane %v143, 2
      %v240 = vrot.slane %v153, 1
      %v242 = vsel %vm175, %v83, %v222
      %v243 = vsel %vm177, %v242, %v225
      %v244 = vsel %vm179, %v243, %v228
      %v245 = vsel %vm181, %v244, %v231
      %v246 = vsel %vm183, %v245, %v234
      %v247 = vsel %vm185, %v246, %v237
      %v248 = vsel %vm187, %v247, %v240
      %s249 = scalar_lea.vmem [#allocation4], %s73
      %250 = vst [vmem:[%s249] sm:$0xff] %v248
    $region22: #{tpu_custom_call.1} parent=1 // loop_footer
      %s72 = sadd.s32 1, %s68
    $region23: #{tpu_custom_call.1} parent=1 // loop_footer_branch
      %67 = sbr.rel target = $region19
    $region24: #{tpu_custom_call.1} parent=1 // loop_exit
      _
    %v251 = vld [vmem:[#allocation2] sm:$0xff]
    %v252 = vld [vmem:[#allocation2 + $0x8] sm:$0xff]
    %v253 = vld [vmem:[#allocation2 + $0x10] sm:$0xff]
    %v254 = vld [vmem:[#allocation2 + $0x18] sm:$0xff]
    %v255 = vld [vmem:[#allocation2 + $0x20] sm:$0xff]
    %v256 = vld [vmem:[#allocation2 + $0x28] sm:$0xff]
    %v257 = vld [vmem:[#allocation2 + $0x30] sm:$0xff]
    %v258 = vld [vmem:[#allocation2 + $0x38] sm:$0xff]
    %v259 = vld [vmem:[#allocation2 + $0x40] sm:$0xff]
    %v260 = vld [vmem:[#allocation2 + $0x48] sm:$0xff]
    %v261 = vld [vmem:[#allocation2 + $0x50] sm:$0xff]
    %v262 = vld [vmem:[#allocation2 + $0x58] sm:$0xff]
    %v263 = vld [vmem:[#allocation2 + $0x60] sm:$0xff]
    %v264 = vld [vmem:[#allocation2 + $0x68] sm:$0xff]
    %v265 = vld [vmem:[#allocation2 + $0x70] sm:$0xff]
    %v266 = vld [vmem:[#allocation2 + $0x78] sm:$0xff]
    %v267 = vld [vmem:[#allocation2 + $0x80] sm:$0xff]
    %v268 = vld [vmem:[#allocation2 + $0x88] sm:$0xff]
    %v269 = vld [vmem:[#allocation2 + $0x90] sm:$0xff]
    %v270 = vld [vmem:[#allocation2 + $0x98] sm:$0xff]
    %v271 = vld [vmem:[#allocation2 + $0xa0] sm:$0xff]
    %v272 = vld [vmem:[#allocation2 + $0xa8] sm:$0xff]
    %v273 = vld [vmem:[#allocation2 + $0xb0] sm:$0xff]
    %v274 = vld [vmem:[#allocation2 + $0xb8] sm:$0xff]
    %v275 = vld [vmem:[#allocation2 + $0xc0] sm:$0xff]
    %v276 = vld [vmem:[#allocation3] sm:$0xff]
    %v277 = vld [vmem:[#allocation3 + $0x8] sm:$0xff]
    %v278 = vld [vmem:[#allocation3 + $0x10] sm:$0xff]
    %v279 = vld [vmem:[#allocation3 + $0x18] sm:$0xff]
    %v280 = vld [vmem:[#allocation3 + $0x20] sm:$0xff]
    %v281 = vld [vmem:[#allocation3 + $0x28] sm:$0xff]
    %v282 = vld [vmem:[#allocation3 + $0x30] sm:$0xff]
    %v283 = vld [vmem:[#allocation3 + $0x38] sm:$0xff]
    %v284 = vld [vmem:[#allocation3 + $0x40] sm:$0xff]
    %v285 = vld [vmem:[#allocation3 + $0x48] sm:$0xff]
    %v286 = vld [vmem:[#allocation3 + $0x50] sm:$0xff]
    %v287 = vld [vmem:[#allocation3 + $0x58] sm:$0xff]
    %v288 = vld [vmem:[#allocation3 + $0x60] sm:$0xff]
    %v289 = vld [vmem:[#allocation3 + $0x68] sm:$0xff]
    %v290 = vld [vmem:[#allocation3 + $0x70] sm:$0xff]
    %v291 = vld [vmem:[#allocation3 + $0x78] sm:$0xff]
    %v292 = vld [vmem:[#allocation3 + $0x80] sm:$0xff]
    %v293 = vld [vmem:[#allocation3 + $0x88] sm:$0xff]
    %v294 = vld [vmem:[#allocation3 + $0x90] sm:$0xff]
    %v295 = vld [vmem:[#allocation3 + $0x98] sm:$0xff]
    %v296 = vld [vmem:[#allocation3 + $0xa0] sm:$0xff]
    %v297 = vld [vmem:[#allocation3 + $0xa8] sm:$0xff]
    %v298 = vld [vmem:[#allocation3 + $0xb0] sm:$0xff]
    %v299 = vld [vmem:[#allocation3 + $0xb8] sm:$0xff]
    %v300 = vld [vmem:[#allocation3 + $0xc0] sm:$0xff]
    %v301 = vld [vmem:[#allocation4] sm:$0xff]
    %v302 = vld [vmem:[#allocation4 + $0x8] sm:$0xff]
    %v303 = vld [vmem:[#allocation4 + $0x10] sm:$0xff]
    %v304 = vld [vmem:[#allocation4 + $0x18] sm:$0xff]
    %v305 = vld [vmem:[#allocation4 + $0x20] sm:$0xff]
    %v306 = vld [vmem:[#allocation4 + $0x28] sm:$0xff]
    %v307 = vld [vmem:[#allocation4 + $0x30] sm:$0xff]
    %v308 = vld [vmem:[#allocation4 + $0x38] sm:$0xff]
    %v309 = vld [vmem:[#allocation4 + $0x40] sm:$0xff]
    %v310 = vld [vmem:[#allocation4 + $0x48] sm:$0xff]
    %v311 = vld [vmem:[#allocation4 + $0x50] sm:$0xff]
    %v312 = vld [vmem:[#allocation4 + $0x58] sm:$0xff]
    %v313 = vld [vmem:[#allocation4 + $0x60] sm:$0xff]
    %v314 = vld [vmem:[#allocation4 + $0x68] sm:$0xff]
    %v315 = vld [vmem:[#allocation4 + $0x70] sm:$0xff]
    %v316 = vld [vmem:[#allocation4 + $0x78] sm:$0xff]
    %v317 = vld [vmem:[#allocation4 + $0x80] sm:$0xff]
    %v318 = vld [vmem:[#allocation4 + $0x88] sm:$0xff]
    %v319 = vld [vmem:[#allocation4 + $0x90] sm:$0xff]
    %v320 = vld [vmem:[#allocation4 + $0x98] sm:$0xff]
    %v321 = vld [vmem:[#allocation4 + $0xa0] sm:$0xff]
    %v322 = vld [vmem:[#allocation4 + $0xa8] sm:$0xff]
    %v323 = vld [vmem:[#allocation4 + $0xb0] sm:$0xff]
    %v324 = vld [vmem:[#allocation4 + $0xb8] sm:$0xff]
    %v325 = vld [vmem:[#allocation4 + $0xc0] sm:$0xff]
    %v326 = vmul.f32 %v251, %v276
    %v327 = vmul.f32 %v252, %v277
    %v328 = vmul.f32 %v253, %v278
    %v329 = vmul.f32 %v254, %v279
    %v330 = vmul.f32 %v255, %v280
    %v331 = vmul.f32 %v256, %v281
    %v332 = vmul.f32 %v257, %v282
    %v333 = vmul.f32 %v258, %v283
    %v334 = vmul.f32 %v259, %v284
    %v335 = vmul.f32 %v260, %v285
    %v336 = vmul.f32 %v261, %v286
    %v337 = vmul.f32 %v262, %v287
    %v338 = vmul.f32 %v263, %v288
    %v339 = vmul.f32 %v264, %v289
    %v340 = vmul.f32 %v265, %v290
    %v341 = vmul.f32 %v266, %v291
    %v342 = vmul.f32 %v267, %v292
    %v343 = vmul.f32 %v268, %v293
    %v344 = vmul.f32 %v269, %v294
    %v345 = vmul.f32 %v270, %v295
    %v346 = vmul.f32 %v271, %v296
    %v347 = vmul.f32 %v272, %v297
    %v348 = vmul.f32 %v273, %v298
    %v349 = vmul.f32 %v274, %v299
    %v350 = vmul.f32 %v275, %v300
    %351 = vadd.xlane.f32.xlu0 %v326
    %v352 = vpop.xlane.xlu0 %351
    %353 = vadd.xlane.f32.xlu0 %v327
    %v354 = vpop.xlane.xlu0 %353
    %355 = vadd.xlane.f32.xlu0 %v328
    %v356 = vpop.xlane.xlu0 %355
    %357 = vadd.xlane.f32.xlu0 %v329
    %v358 = vpop.xlane.xlu0 %357
    %359 = vadd.xlane.f32.xlu0 %v330
    %v360 = vpop.xlane.xlu0 %359
    %361 = vadd.xlane.f32.xlu0 %v331
    %v362 = vpop.xlane.xlu0 %361
    %363 = vadd.xlane.f32.xlu0 %v332
    %v364 = vpop.xlane.xlu0 %363
    %365 = vadd.xlane.f32.xlu0 %v333
    %v366 = vpop.xlane.xlu0 %365
    %367 = vadd.xlane.f32.xlu0 %v334
    %v368 = vpop.xlane.xlu0 %367
    %369 = vadd.xlane.f32.xlu0 %v335
    %v370 = vpop.xlane.xlu0 %369
    %371 = vadd.xlane.f32.xlu0 %v336
    %v372 = vpop.xlane.xlu0 %371
    %373 = vadd.xlane.f32.xlu0 %v337
    %v374 = vpop.xlane.xlu0 %373
    %375 = vadd.xlane.f32.xlu0 %v338
    %v376 = vpop.xlane.xlu0 %375
    %377 = vadd.xlane.f32.xlu0 %v339
    %v378 = vpop.xlane.xlu0 %377
    %379 = vadd.xlane.f32.xlu0 %v340
    %v380 = vpop.xlane.xlu0 %379
    %381 = vadd.xlane.f32.xlu0 %v341
    %v382 = vpop.xlane.xlu0 %381
    %383 = vadd.xlane.f32.xlu0 %v342
    %v384 = vpop.xlane.xlu0 %383
    %385 = vadd.xlane.f32.xlu0 %v343
    %v386 = vpop.xlane.xlu0 %385
    %387 = vadd.xlane.f32.xlu0 %v344
    %v388 = vpop.xlane.xlu0 %387
    %389 = vadd.xlane.f32.xlu0 %v345
    %v390 = vpop.xlane.xlu0 %389
    %391 = vadd.xlane.f32.xlu0 %v346
    %v392 = vpop.xlane.xlu0 %391
    %393 = vadd.xlane.f32.xlu0 %v347
    %v394 = vpop.xlane.xlu0 %393
    %395 = vadd.xlane.f32.xlu0 %v348
    %v396 = vpop.xlane.xlu0 %395
    %397 = vadd.xlane.f32.xlu0 %v349
    %v398 = vpop.xlane.xlu0 %397
    %399 = vadd.xlane.f32.xlu0 %v350
    %v400 = vpop.xlane.xlu0 %399
    %vm401 = vcmask 7168
    %402 = vst.msk [vmem:[%s5] sm:$0xff] %vm401, %v352
    %403 = vst.msk [vmem:[%s5 + $0x8] sm:$0xff] %vm401, %v354
    %404 = vst.msk [vmem:[%s5 + $0x10] sm:$0xff] %vm401, %v356
    %405 = vst.msk [vmem:[%s5 + $0x18] sm:$0xff] %vm401, %v358
    %406 = vst.msk [vmem:[%s5 + $0x20] sm:$0xff] %vm401, %v360
    %407 = vst.msk [vmem:[%s5 + $0x28] sm:$0xff] %vm401, %v362
    %408 = vst.msk [vmem:[%s5 + $0x30] sm:$0xff] %vm401, %v364
    %409 = vst.msk [vmem:[%s5 + $0x38] sm:$0xff] %vm401, %v366
    %410 = vst.msk [vmem:[%s5 + $0x40] sm:$0xff] %vm401, %v368
    %411 = vst.msk [vmem:[%s5 + $0x48] sm:$0xff] %vm401, %v370
    %412 = vst.msk [vmem:[%s5 + $0x50] sm:$0xff] %vm401, %v372
    %413 = vst.msk [vmem:[%s5 + $0x58] sm:$0xff] %vm401, %v374
    %414 = vst.msk [vmem:[%s5 + $0x60] sm:$0xff] %vm401, %v376
    %415 = vst.msk [vmem:[%s5 + $0x68] sm:$0xff] %vm401, %v378
    %416 = vst.msk [vmem:[%s5 + $0x70] sm:$0xff] %vm401, %v380
    %417 = vst.msk [vmem:[%s5 + $0x78] sm:$0xff] %vm401, %v382
    %418 = vst.msk [vmem:[%s5 + $0x80] sm:$0xff] %vm401, %v384
    %419 = vst.msk [vmem:[%s5 + $0x88] sm:$0xff] %vm401, %v386
    %420 = vst.msk [vmem:[%s5 + $0x90] sm:$0xff] %vm401, %v388
    %421 = vst.msk [vmem:[%s5 + $0x98] sm:$0xff] %vm401, %v390
    %422 = vst.msk [vmem:[%s5 + $0xa0] sm:$0xff] %vm401, %v392
    %423 = vst.msk [vmem:[%s5 + $0xa8] sm:$0xff] %vm401, %v394
    %424 = vst.msk [vmem:[%s5 + $0xb0] sm:$0xff] %vm401, %v396
    %425 = vst.msk [vmem:[%s5 + $0xb8] sm:$0xff] %vm401, %v398
    %426 = vst.msk [vmem:[%s5 + $0xc0] sm:$0xff] %vm401, %v400
    %v427 = vmul.f32 %v251, %v301
    %v428 = vmul.f32 %v252, %v302
    %v429 = vmul.f32 %v253, %v303
    %v430 = vmul.f32 %v254, %v304
    %v431 = vmul.f32 %v255, %v305
    %v432 = vmul.f32 %v256, %v306
    %v433 = vmul.f32 %v257, %v307
    %v434 = vmul.f32 %v258, %v308
    %v435 = vmul.f32 %v259, %v309
    %v436 = vmul.f32 %v260, %v310
    %v437 = vmul.f32 %v261, %v311
    %v438 = vmul.f32 %v262, %v312
    %v439 = vmul.f32 %v263, %v313
    %v440 = vmul.f32 %v264, %v314
    %v441 = vmul.f32 %v265, %v315
    %v442 = vmul.f32 %v266, %v316
    %v443 = vmul.f32 %v267, %v317
    %v444 = vmul.f32 %v268, %v318
    %v445 = vmul.f32 %v269, %v319
    %v446 = vmul.f32 %v270, %v320
    %v447 = vmul.f32 %v271, %v321
    %v448 = vmul.f32 %v272, %v322
    %v449 = vmul.f32 %v273, %v323
    %v450 = vmul.f32 %v274, %v324
    %v451 = vmul.f32 %v275, %v325
    %452 = vadd.xlane.f32.xlu0 %v427
    %v453 = vpop.xlane.xlu0 %452
    %454 = vadd.xlane.f32.xlu0 %v428
    %v455 = vpop.xlane.xlu0 %454
    %456 = vadd.xlane.f32.xlu0 %v429
    %v457 = vpop.xlane.xlu0 %456
    %458 = vadd.xlane.f32.xlu0 %v430
    %v459 = vpop.xlane.xlu0 %458
    %460 = vadd.xlane.f32.xlu0 %v431
    %v461 = vpop.xlane.xlu0 %460
    %462 = vadd.xlane.f32.xlu0 %v432
    %v463 = vpop.xlane.xlu0 %462
    %464 = vadd.xlane.f32.xlu0 %v433
    %v465 = vpop.xlane.xlu0 %464
    %466 = vadd.xlane.f32.xlu0 %v434
    %v467 = vpop.xlane.xlu0 %466
    %468 = vadd.xlane.f32.xlu0 %v435
    %v469 = vpop.xlane.xlu0 %468
    %470 = vadd.xlane.f32.xlu0 %v436
    %v471 = vpop.xlane.xlu0 %470
    %472 = vadd.xlane.f32.xlu0 %v437
    %v473 = vpop.xlane.xlu0 %472
    %474 = vadd.xlane.f32.xlu0 %v438
    %v475 = vpop.xlane.xlu0 %474
    %476 = vadd.xlane.f32.xlu0 %v439
    %v477 = vpop.xlane.xlu0 %476
    %478 = vadd.xlane.f32.xlu0 %v440
    %v479 = vpop.xlane.xlu0 %478
    %480 = vadd.xlane.f32.xlu0 %v441
    %v481 = vpop.xlane.xlu0 %480
    %482 = vadd.xlane.f32.xlu0 %v442
    %v483 = vpop.xlane.xlu0 %482
    %484 = vadd.xlane.f32.xlu0 %v443
    %v485 = vpop.xlane.xlu0 %484
    %486 = vadd.xlane.f32.xlu0 %v444
    %v487 = vpop.xlane.xlu0 %486
    %488 = vadd.xlane.f32.xlu0 %v445
    %v489 = vpop.xlane.xlu0 %488
    %490 = vadd.xlane.f32.xlu0 %v446
    %v491 = vpop.xlane.xlu0 %490
    %492 = vadd.xlane.f32.xlu0 %v447
    %v493 = vpop.xlane.xlu0 %492
    %494 = vadd.xlane.f32.xlu0 %v448
    %v495 = vpop.xlane.xlu0 %494
    %496 = vadd.xlane.f32.xlu0 %v449
    %v497 = vpop.xlane.xlu0 %496
    %498 = vadd.xlane.f32.xlu0 %v450
    %v499 = vpop.xlane.xlu0 %498
    %500 = vadd.xlane.f32.xlu0 %v451
    %v501 = vpop.xlane.xlu0 %500
    %502 = vst.msk [vmem:[%s6] sm:$0xff] %vm401, %v453
    %503 = vst.msk [vmem:[%s6 + $0x8] sm:$0xff] %vm401, %v455
    %504 = vst.msk [vmem:[%s6 + $0x10] sm:$0xff] %vm401, %v457
    %505 = vst.msk [vmem:[%s6 + $0x18] sm:$0xff] %vm401, %v459
    %506 = vst.msk [vmem:[%s6 + $0x20] sm:$0xff] %vm401, %v461
    %507 = vst.msk [vmem:[%s6 + $0x28] sm:$0xff] %vm401, %v463
    %508 = vst.msk [vmem:[%s6 + $0x30] sm:$0xff] %vm401, %v465
    %509 = vst.msk [vmem:[%s6 + $0x38] sm:$0xff] %vm401, %v467
    %510 = vst.msk [vmem:[%s6 + $0x40] sm:$0xff] %vm401, %v469
    %511 = vst.msk [vmem:[%s6 + $0x48] sm:$0xff] %vm401, %v471
    %512 = vst.msk [vmem:[%s6 + $0x50] sm:$0xff] %vm401, %v473
    %513 = vst.msk [vmem:[%s6 + $0x58] sm:$0xff] %vm401, %v475
    %514 = vst.msk [vmem:[%s6 + $0x60] sm:$0xff] %vm401, %v477
    %515 = vst.msk [vmem:[%s6 + $0x68] sm:$0xff] %vm401, %v479
    %516 = vst.msk [vmem:[%s6 + $0x70] sm:$0xff] %vm401, %v481
    %517 = vst.msk [vmem:[%s6 + $0x78] sm:$0xff] %vm401, %v483
    %518 = vst.msk [vmem:[%s6 + $0x80] sm:$0xff] %vm401, %v485
    %519 = vst.msk [vmem:[%s6 + $0x88] sm:$0xff] %vm401, %v487
    %520 = vst.msk [vmem:[%s6 + $0x90] sm:$0xff] %vm401, %v489
    %521 = vst.msk [vmem:[%s6 + $0x98] sm:$0xff] %vm401, %v491
    %522 = vst.msk [vmem:[%s6 + $0xa0] sm:$0xff] %vm401, %v493
    %523 = vst.msk [vmem:[%s6 + $0xa8] sm:$0xff] %vm401, %v495
    %524 = vst.msk [vmem:[%s6 + $0xb0] sm:$0xff] %vm401, %v497
    %525 = vst.msk [vmem:[%s6 + $0xb8] sm:$0xff] %vm401, %v499
    %526 = vst.msk [vmem:[%s6 + $0xc0] sm:$0xff] %vm401, %v501
    // Predicated region
    $region25: #{tpu_custom_call.1} parent=1 // pred_check
      _
    $region26: #{tpu_custom_call.1} parent=1 // pred_check_branch
      %528 = sbr.rel (0) target = $region28
    $region27: #{tpu_custom_call.1} parent=1 // pred_region
      _
    $region28: #{tpu_custom_call.1} parent=1 // pred_fallthru
      _
    // Predicated region
    $region29: #{tpu_custom_call.1} parent=1 // pred_check
      _
    $region30: #{tpu_custom_call.1} parent=1 // pred_check_branch
      %530 = sbr.rel (0) target = $region32
    $region31: #{tpu_custom_call.1} parent=1 // pred_region
      _
    $region32: #{tpu_custom_call.1} parent=1 // pred_fallthru
      _
    // Predicated region
    $region33: #{tpu_custom_call.1} parent=1 // pred_check
      _
    $region34: #{tpu_custom_call.1} parent=1 // pred_check_branch
      %532 = sbr.rel (0) target = $region36
    $region35: #{tpu_custom_call.1} parent=1 // pred_region
      _
    $region36: #{tpu_custom_call.1} parent=1 // pred_fallthru
      _
    // Predicated region
    $region37: #{tpu_custom_call.1} parent=1 // pred_check
      _
    $region38: #{tpu_custom_call.1} parent=1 // pred_check_branch
      %534 = sbr.rel (0) target = $region40
    $region39: #{tpu_custom_call.1} parent=1 // pred_region
      _
    $region40: #{tpu_custom_call.1} parent=1 // pred_fallthru
      _
    %535 = vsyncpa [#allocation10], 1
    %536 = vsyncpa [#allocation12], 1

</llo_original>
